<compile_context>
chip_gen: v7x
topology: tpu7x:2x2x1
jax: 0.10.0
libtpu: 0.0.40
codegen_flags: <defaults>
</compile_context>

<pallas_src>
import functools

import jax
import jax.numpy as jnp
from jax.experimental import pallas as pl
from jax.experimental.pallas import tpu as pltpu


def _round_up(n: int, m: int) -> int:
    return (n + m - 1) // m * m


def _tpu_generation() -> int:
    """Best-effort TPU generation (5 / 6 / 7); defaults to 6 if unknown."""
    try:
        kind = jax.devices()[0].device_kind.lower()
    except Exception:  # pragma: no cover - non-TPU / query failure
        return 6
    if "v5" in kind:
        return 5
    if "v6" in kind:
        return 6
    if "v7" in kind:
        return 7
    return 6


def _choose_tiles(h_pad, d_in, tm, *, w_itemsize, x_itemsize, out_itemsize, gen):
    """Pick the largest 128-multiple column tile whose *pipelined* footprint fits.

    Footprint = 2x weight tile + 2x output tile + 2x bias tile (double
    buffering) + 2x the x block.  Returns (tn, vmem_limit_bytes).
    """
    if gen == 7:
        budget = 40 << 20           # v7x: 64 MiB physical VMEM -> leave headroom
        weight_tile_cap = 8 << 20   # <=16 MiB with double buffering
    elif gen == 5:
        budget = 64 << 20           # v5e: 128 MiB physical, 16 MiB scoped default
        weight_tile_cap = 12 << 20
    else:
        budget = 64 << 20           # v6e: 128 MiB physical, 32 MiB scoped default
        weight_tile_cap = 16 << 20

    x_bytes = 2 * tm * d_in * x_itemsize  # x block (double-buffered across batch tiles)

    tn_best = 128
    tn = h_pad
    while tn >= 128:
        if h_pad % tn == 0:
            w_bytes = d_in * tn * w_itemsize
            out_bytes = tm * tn * out_itemsize
            total = x_bytes + 2 * (w_bytes + out_bytes + tn * 4)
            fits = (w_bytes <= weight_tile_cap) and (total <= budget)
            single_step = (h_pad // tn) == 1
            # On v7x keep >=2 column steps so the "parallel" axis can shard
            # across the two TensorCores.
            if fits and not (gen == 7 and single_step and h_pad >= 256):
                tn_best = tn
                break
        tn -= 128
    tn = tn_best

    w_bytes = d_in * tn * w_itemsize
    out_bytes = tm * tn * out_itemsize
    total = x_bytes + 2 * (w_bytes + out_bytes + tn * 4)
    vmem_limit = max(int(total) + (8 << 20), 32 << 20)
    vmem_limit = min(vmem_limit, (60 << 20) if gen == 7 else (100 << 20))
    return tn, vmem_limit


def prepare_encoder_params(w, b, *, compute_dtype=jnp.bfloat16):
    """One-time parameter prep.  Do NOT call inside the per-step forward.

    w: (d_in, hidden)  -- PyTorch fc.weight transposed
    b: (hidden,)
    Returns (w_padded, b_padded, hidden) with hidden padded to a multiple of
    128 lanes, weight cast to `compute_dtype` (bf16 halves weight HBM traffic),
    bias kept f32 (added in f32 inside the kernel).
    """
    d_in, hidden = w.shape
    h_pad = _round_up(hidden, 128)
    if h_pad != hidden:
        w = jnp.pad(w, ((0, 0), (0, h_pad - hidden)))
        b = jnp.pad(b, ((0, h_pad - hidden),))
    w = jnp.asarray(w, compute_dtype)
    b = jnp.asarray(b, jnp.float32).reshape(1, h_pad)
    return w, b, hidden


def encoder_kernel(x_ref, w_ref, b_ref, y_ref):
    # One (batch tile, output-column tile) per grid step:
    #   y[i*TM:(i+1)*TM, j*TN:(j+1)*TN] = x_tile @ W[:, j*TN:(j+1)*TN] + b[j*TN:(j+1)*TN]
    acc = jnp.dot(x_ref[...], w_ref[...], preferred_element_type=jnp.float32)
    y_ref[...] = (acc + b_ref[...]).astype(y_ref.dtype)


@functools.partial(jax.jit, static_argnames=("hidden",))
def encoder_forward(x, w_pad, b_pad, *, hidden):
    """Linear forward: y = x @ W + b with pre-padded params.

    x:     (B, d_in)       activations (f32)
    w_pad: (d_in, h_pad)   padded weight in the streaming dtype (bf16 or f32)
    b_pad: (1, h_pad)      padded bias, f32
    returns y: (B, hidden) in x.dtype
    """
    B, d_in = x.shape
    d_in_w, h_pad = w_pad.shape
    assert d_in_w == d_in, (d_in_w, d_in)
    assert h_pad % 128 == 0, h_pad

    gen = _tpu_generation()
    compute_dtype = w_pad.dtype
    x_c = x.astype(compute_dtype)

    # Batch tiling: small batches stay as one resident block; large batches are
    # tiled to fill the MXU rows (128 on v5e, 256 on v6e/v7x).
    tm_cap = 128 if gen == 5 else 256
    if B <= tm_cap:
        tm = B
        b_rows = B
    else:
        tm = tm_cap
        b_rows = _round_up(B, tm)
        if b_rows != B:
            x_c = jnp.pad(x_c, ((0, b_rows - B), (0, 0)))
    n_m = b_rows // tm

    itemsize = jnp.dtype(compute_dtype).itemsize
    tn, vmem_limit = _choose_tiles(
        h_pad, d_in, tm,
        w_itemsize=itemsize,
        x_itemsize=itemsize,
        out_itemsize=jnp.dtype(x.dtype).itemsize,
        gen=gen,
    )

    # Batch axis is INNERMOST so the weight column tile stays resident in VMEM
    # across all batch tiles (weight fetched from HBM exactly once).
    grid = (h_pad // tn, n_m)

    y_pad = pl.pallas_call(
        encoder_kernel,
        grid=grid,
        in_specs=[
            pl.BlockSpec((tm, d_in), lambda j, i: (i, 0)),   # x batch tile
            pl.BlockSpec((d_in, tn), lambda j, i: (0, j)),   # weight column tile (resident over i)
            pl.BlockSpec((1, tn), lambda j, i: (0, j)),      # bias tile (f32)
        ],
        out_specs=pl.BlockSpec((tm, tn), lambda j, i: (i, j)),
        out_shape=jax.ShapeDtypeStruct((b_rows, h_pad), x.dtype),
        compiler_params=pltpu.CompilerParams(
            dimension_semantics=("parallel", "arbitrary"),
            vmem_limit_bytes=vmem_limit,
        ),
    )(x_c, w_pad, b_pad)

    return y_pad[:B, :hidden]


def _run_case(key, batch, d_in, hidden, *, compute_dtype, atol, rtol):
    kx, kw_, kb = jax.random.split(key, 3)
    x = jax.random.normal(kx, (batch, d_in), dtype=jnp.float32)
    bound = 1.0 / float(jnp.sqrt(jnp.float32(d_in)))
    w = jax.random.uniform(kw_, (d_in, hidden), jnp.float32, -bound, bound)
    b = jax.random.uniform(kb, (hidden,), jnp.float32, -bound, bound)

    # One-time parameter prep (outside the per-step forward).
    w_p, b_p, hidden_logical = prepare_encoder_params(w, b, compute_dtype=compute_dtype)

    y = encoder_forward(x, w_p, b_p, hidden=hidden_logical)
    jax.block_until_ready(y)

    y_ref = x @ w + b
    assert y.shape == (batch, hidden), y.shape
    err = float(jnp.max(jnp.abs(y - y_ref)))
    assert jnp.allclose(y, y_ref, atol=atol, rtol=rtol), err


if __name__ == "__main__":
    key = jax.random.PRNGKey(0)
    k1, k2, k3 = jax.random.split(key, 3)

    # Exact f32 path, non-128-aligned hidden (exercises lane padding; tight tol).
    _run_case(k1, 16, 128, 200, compute_dtype=jnp.float32, atol=1e-4, rtol=1e-4)

    # Module's default hidden=2000 (reduced d_in to stay small), bf16 weight
    # streaming with f32 accumulation — the production configuration.
    _run_case(k2, 16, 128, 2000, compute_dtype=jnp.bfloat16, atol=3e-2, rtol=3e-2)

    # Large batch: exercises the batch-tile grid axis (innermost) with the
    # weight column tile resident across batch tiles.
    _run_case(k3, 512, 128, 256, compute_dtype=jnp.bfloat16, atol=3e-2, rtol=3e-2)

    print("KERNEL_OK")
</pallas_src>

<mosaic_0001>
module attributes {stable_mosaic.version = 11 : i64} {
  func.func @encoder_kernel(%arg0: i32, %arg1: i32, %arg2: memref<16x128xf32, #tpu.memory_space<vmem>>, %arg3: memref<128x256xf32, #tpu.memory_space<vmem>>, %arg4: memref<1x256xf32, #tpu.memory_space<vmem>>, %arg5: memref<16x256xf32, #tpu.memory_space<vmem>>) attributes {dimension_semantics = [#tpu.dimension_semantics<parallel>, #tpu.dimension_semantics<arbitrary>], iteration_bounds = array<i64: 1, 1>, scalar_prefetch = 0 : i64, scratch_operands = 0 : i64, tpu.core_type = #tpu.core_type<tc>, window_params = [{transform_indices = @transform_0, window_bounds = array<i64: 16, 128>}, {transform_indices = @transform_1, window_bounds = array<i64: 128, 256>}, {transform_indices = @transform_2, window_bounds = array<i64: 1, 256>}, {transform_indices = @transform_3, window_bounds = array<i64: 16, 256>}]} {
    %c0 = arith.constant 0 : index
    %c0_0 = arith.constant 0 : index
    %0 = vector.load %arg2[%c0, %c0_0] : memref<16x128xf32, #tpu.memory_space<vmem>>, vector<16x128xf32>
    %c0_1 = arith.constant 0 : index
    %c0_2 = arith.constant 0 : index
    %1 = vector.load %arg3[%c0_1, %c0_2] : memref<128x256xf32, #tpu.memory_space<vmem>>, vector<128x256xf32>
    %cst = arith.constant dense<0.000000e+00> : vector<16x256xf32>
    %2 = tpu.matmul %0, %1, %cst {dimension_numbers = #tpu.dot_dimension_numbers<[1], [0], [0], [1], [0, 0, 1, 1], [], []>} : vector<16x128xf32>, vector<128x256xf32>, vector<16x256xf32> -> vector<16x256xf32>
    %c0_3 = arith.constant 0 : index
    %c0_4 = arith.constant 0 : index
    %3 = vector.load %arg4[%c0_3, %c0_4] : memref<1x256xf32, #tpu.memory_space<vmem>>, vector<1x256xf32>
    %4 = vector.broadcast %3 : vector<1x256xf32> to vector<16x256xf32>
    %5 = arith.addf %2, %4 : vector<16x256xf32>
    %c0_5 = arith.constant 0 : index
    %c0_6 = arith.constant 0 : index
    %6 = vector.load %arg5[%c0_5, %c0_6] : memref<16x256xf32, #tpu.memory_space<vmem>>, vector<16x256xf32>
    tpu.vector_store %arg5[%c0_5, %c0_6], %5 {strides = array<i32>} : memref<16x256xf32, #tpu.memory_space<vmem>>, vector<16x256xf32>,
    return
  }
  func.func @transform_0(%arg0: i32, %arg1: i32) -> (i32, i32) {
    %c0_i32 = arith.constant 0 : i32
    %c0_i32_0 = arith.constant 0 : i32
    return %arg1, %c0_i32 : i32, i32
  }
  func.func @transform_1(%arg0: i32, %arg1: i32) -> (i32, i32) {
    %c0_i32 = arith.constant 0 : i32
    %c0_i32_0 = arith.constant 0 : i32
    return %c0_i32, %arg0 : i32, i32
  }
  func.func @transform_2(%arg0: i32, %arg1: i32) -> (i32, i32) {
    %c0_i32 = arith.constant 0 : i32
    %c0_i32_0 = arith.constant 0 : i32
    return %c0_i32, %arg0 : i32, i32
  }
  func.func @transform_3(%arg0: i32, %arg1: i32) -> (i32, i32) {
    %c0_i32 = arith.constant 0 : i32
    return %arg1, %arg0 : i32, i32
  }
}

</mosaic_0001>

<llo_original>
// kernel: encoder_forward.1
$region0: #{encoder_forward.1}
  #allocation0 [shape = 'u32[]', space=smem, size = 0x4, offset = 0x4, fixed_abs, tag = 'smem constant byte address 0x4 - core index']
  #allocation1 [shape = 'u32[144,128]{1,0:T(1,128)}', space=vmem, size = 0x12000, scoped, tag = 'internal scratch']
  %s0 = inlined_call_operand.hbm [shape: f32[16,128], index: 0, kind: input, shape index: {}]
  %s1 = inlined_call_operand.hbm [shape: f32[128,256], index: 1, kind: input, shape index: {}]
  %s2 = inlined_call_operand.vmem [shape: f32[1,256], index: 2, kind: input, shape index: {}]
  %s3 = inlined_call_operand.hbm [shape: f32[16,256], index: 3, kind: output, shape index: {}]
  %s4 = sld [smem:[#allocation0]]
  $region30: #{encoder_forward.1} parent=0
    _
  %s6 = ssub.s32 1, %s4
  %s7 = scalar_select 0, %s6, %s4
  $region1: #{encoder_forward.1} parent=0
    #allocation2 [shape = 'u8[8192]{0}', space=vmem, size = 0x2000, scoped, tag = 'input window, operand 0, single buffered']
    #allocation3 [shape = 's32[1]{0}', space=sflag, size = 0x4, scoped, tag = 'scoped memory for encoder_forward.1']
    #allocation4 [shape = 's32[1]{0}', space=sflag, size = 0x4, scoped, tag = 'scoped memory for encoder_forward.1']
    #allocation5 [shape = 'u8[131072]{0}', space=vmem, size = 0x20000, scoped, tag = 'input window, operand 1, single buffered']
    #allocation6 [shape = 's32[1]{0}', space=sflag, size = 0x4, scoped, tag = 'scoped memory for encoder_forward.1']
    #allocation7 [shape = 'u8[16384]{0}', space=vmem, size = 0x4000, scoped, tag = 'output window, operand 0, single buffered']
    %8 = vsyncpa [#allocation3], 0
    %9 = vsyncpa [#allocation6], 0
    %10 = vsyncpa [#allocation4], 0
    // Predicated region
    $region2: #{encoder_forward.1} parent=1 // pred_check
      _
    $region3: #{encoder_forward.1} parent=1 // pred_check_branch
      %12 = sbr.rel (0) target = $region5
    $region4: #{encoder_forward.1} parent=1 // pred_region
      %s14 = ssub.s32 256, 256
      %15 = vsyncadd [#allocation3], %s14
      %s16 = sshll.u32 [#allocation2], 4
      %s17 = int_to_ptr.vmem [resolvable:$true] %s16
      %22 = dma.hbm_to_vmem [thread:$0]  %s0, 256, %s17, [#allocation3], 128, 128, 8
    $region5: #{encoder_forward.1} parent=1 // pred_fallthru
      _
    // Predicated region
    $region6: #{encoder_forward.1} parent=1 // pred_check
      _
    $region7: #{encoder_forward.1} parent=1 // pred_check_branch
      %24 = sbr.rel (0) target = $region9
    $region8: #{encoder_forward.1} parent=1 // pred_region
      %s26 = ssub.s32 4096, 4096
      %27 = vsyncadd [#allocation6], %s26
      %s28 = sshll.u32 [#allocation5], 4
      %s29 = int_to_ptr.vmem [resolvable:$true] %s28
      %34 = dma.hbm_to_vmem [thread:$0]  %s1, 4096, %s29, [#allocation6], 256, 256, 16
    $region9: #{encoder_forward.1} parent=1 // pred_fallthru
      _
    // Predicated region
    $region10: #{encoder_forward.1} parent=1 // pred_check
      _
    $region11: #{encoder_forward.1} parent=1 // pred_check_branch
      %36 = sbr.rel (0) target = $region13
    $region12: #{encoder_forward.1} parent=1 // pred_region
      _
    $region13: #{encoder_forward.1} parent=1 // pred_fallthru
      _
    // Predicated region
    $region14: #{encoder_forward.1} parent=1 // pred_check
      _
    $region15: #{encoder_forward.1} parent=1 // pred_check_branch
      %38 = sbr.rel (0) target = $region17
    $region16: #{encoder_forward.1} parent=1 // pred_region
      %39 = dma.done [#allocation3], 256
    $region17: #{encoder_forward.1} parent=1 // pred_fallthru
      _
    // Predicated region
    $region18: #{encoder_forward.1} parent=1 // pred_check
      _
    $region19: #{encoder_forward.1} parent=1 // pred_check_branch
      %41 = sbr.rel (0) target = $region21
    $region20: #{encoder_forward.1} parent=1 // pred_region
      %42 = dma.done [#allocation6], 4096
    $region21: #{encoder_forward.1} parent=1 // pred_fallthru
      _
    %v43 = vld [vmem:[#allocation2] sm:$0xff]
    %v44 = vld [vmem:[#allocation2 + $0x8] sm:$0xff]
    %v45 = vld [vmem:[#allocation5] sm:$0xff]
    %v46 = vld [vmem:[#allocation5 + $0x8] sm:$0xff]
    %v47 = vld [vmem:[#allocation5 + $0x10] sm:$0xff]
    %v48 = vld [vmem:[#allocation5 + $0x18] sm:$0xff]
    %v49 = vld [vmem:[#allocation5 + $0x20] sm:$0xff]
    %v50 = vld [vmem:[#allocation5 + $0x28] sm:$0xff]
    %v51 = vld [vmem:[#allocation5 + $0x30] sm:$0xff]
    %v52 = vld [vmem:[#allocation5 + $0x38] sm:$0xff]
    %v53 = vld [vmem:[#allocation5 + $0x40] sm:$0xff]
    %v54 = vld [vmem:[#allocation5 + $0x48] sm:$0xff]
    %v55 = vld [vmem:[#allocation5 + $0x50] sm:$0xff]
    %v56 = vld [vmem:[#allocation5 + $0x58] sm:$0xff]
    %v57 = vld [vmem:[#allocation5 + $0x60] sm:$0xff]
    %v58 = vld [vmem:[#allocation5 + $0x68] sm:$0xff]
    %v59 = vld [vmem:[#allocation5 + $0x70] sm:$0xff]
    %v60 = vld [vmem:[#allocation5 + $0x78] sm:$0xff]
    %v61 = vld [vmem:[#allocation5 + $0x80] sm:$0xff]
    %v62 = vld [vmem:[#allocation5 + $0x88] sm:$0xff]
    %v63 = vld [vmem:[#allocation5 + $0x90] sm:$0xff]
    %v64 = vld [vmem:[#allocation5 + $0x98] sm:$0xff]
    %v65 = vld [vmem:[#allocation5 + $0xa0] sm:$0xff]
    %v66 = vld [vmem:[#allocation5 + $0xa8] sm:$0xff]
    %v67 = vld [vmem:[#allocation5 + $0xb0] sm:$0xff]
    %v68 = vld [vmem:[#allocation5 + $0xb8] sm:$0xff]
    %v69 = vld [vmem:[#allocation5 + $0xc0] sm:$0xff]
    %v70 = vld [vmem:[#allocation5 + $0xc8] sm:$0xff]
    %v71 = vld [vmem:[#allocation5 + $0xd0] sm:$0xff]
    %v72 = vld [vmem:[#allocation5 + $0xd8] sm:$0xff]
    %v73 = vld [vmem:[#allocation5 + $0xe0] sm:$0xff]
    %v74 = vld [vmem:[#allocation5 + $0xe8] sm:$0xff]
    %v75 = vld [vmem:[#allocation5 + $0xf0] sm:$0xff]
    %v76 = vld [vmem:[#allocation5 + $0xf8] sm:$0xff]
    %v77 = vld [vmem:[%s2] sm:$0x3]
    %v79 = vlaneseq
    %v80 = vshrl.u32 %v79, 7
    %v81 = vsub.s32 0, %v80
    %v82 = vrot.slane %v77, %v81
    %v83 = vlaneseq
    %v84 = vshrl.u32 %v83, 7
    %v85 = vsub.s32 1, %v84
    %v86 = vrot.slane %v77, %v85
    %89 = vmatprep.subr.mxu0 %v46
    %90 = vmatpush1.msra.mxu0 %v45
    %91 = vmatprep.subr.mxu0 %v48
    %92 = vmatpush1.msra.mxu0 %v47
    %93 = vmatprep.subr.mxu0 %v50
    %94 = vmatpush1.msra.mxu0 %v49
    %95 = vmatprep.subr.mxu0 %v52
    %96 = vmatpush1.msra.mxu0 %v51
    %97 = vmatprep.subr.mxu0 %v54
    %98 = vmatpush1.msra.mxu0 %v53
    %99 = vmatprep.subr.mxu0 %v56
    %100 = vmatpush1.msra.mxu0 %v55
    %101 = vmatprep.subr.mxu0 %v58
    %102 = vmatpush1.msra.mxu0 %v57
    %103 = vmatprep.subr.mxu0 %v60
    %104 = vmatpush1.msra.mxu0 %v59
    %105 = vmatprep.subr.mxu0 %v62
    %106 = vmatpush1.msra.mxu0 %v61
    %107 = vmatprep.subr.mxu0 %v64
    %108 = vmatpush1.msra.mxu0 %v63
    %109 = vmatprep.subr.mxu0 %v66
    %110 = vmatpush1.msra.mxu0 %v65
    %111 = vmatprep.subr.mxu0 %v68
    %112 = vmatpush1.msra.mxu0 %v67
    %113 = vmatprep.subr.mxu0 %v70
    %114 = vmatpush1.msra.mxu0 %v69
    %115 = vmatprep.subr.mxu0 %v72
    %116 = vmatpush1.msra.mxu0 %v71
    %117 = vmatprep.subr.mxu0 %v74
    %118 = vmatpush1.msra.mxu0 %v73
    %119 = vmatprep.subr.mxu0 %v76
    %120 = vmatpush1.msra.mxu0 %v75
    %121 = vmatprep.subr.mxu0 0.0
    %122 = vmatpush1.msra.mxu0 0.0
    %123 = vmatprep.subr.mxu0 0.0
    %124 = vmatpush1.msra.mxu0 0.0
    %125 = vmatprep.subr.mxu0 0.0
    %126 = vmatpush1.msra.mxu0 0.0
    %127 = vmatprep.subr.mxu0 0.0
    %128 = vmatpush1.msra.mxu0 0.0
    %129 = vmatprep.subr.mxu0 0.0
    %130 = vmatpush1.msra.mxu0 0.0
    %131 = vmatprep.subr.mxu0 0.0
    %132 = vmatpush1.msra.mxu0 0.0
    %133 = vmatprep.subr.mxu0 0.0
    %134 = vmatpush1.msra.mxu0 0.0
    %135 = vmatprep.subr.mxu0 0.0
    %136 = vmatpush1.msra.mxu0 0.0
    %137 = vmatprep.subr.mxu0 0.0
    %138 = vmatpush1.msra.mxu0 0.0
    %139 = vmatprep.subr.mxu0 0.0
    %140 = vmatpush1.msra.mxu0 0.0
    %141 = vmatprep.subr.mxu0 0.0
    %142 = vmatpush1.msra.mxu0 0.0
    %143 = vmatprep.subr.mxu0 0.0
    %144 = vmatpush1.msra.mxu0 0.0
    %145 = vmatprep.subr.mxu0 0.0
    %146 = vmatpush1.msra.mxu0 0.0
    %147 = vmatprep.subr.mxu0 0.0
    %148 = vmatpush1.msra.mxu0 0.0
    %149 = vmatprep.subr.mxu0 0.0
    %150 = vmatpush1.msra.mxu0 0.0
    %151 = vmatprep.subr.mxu0 0.0
    %152 = vmatpush1.msra.mxu0 0.0
    %153 = vmatprep.mubr.f32.mxu0 0.0
    %154 = vmatmul.mubr.f32.gmra.mrb[0].mxu0 %v43
    %v155 = vpop.f32.mrb[0].mxu0
    %v156 = vadd.f32 %v82, %v155
    %v157 = vpop.f32.mrb[0].mxu0
    %v158 = vadd.f32 %v86, %v157
    %159 = vmatprep.mubr.f32.mxu0 0.0
    %160 = vmatmul.mubr.f32.gmra.mrb[0].mxu0 %v44
    %v161 = vpop.f32.mrb[0].mxu0
    %v162 = vadd.f32 %v82, %v161
    %v163 = vpop.f32.mrb[0].mxu0
    %v164 = vadd.f32 %v86, %v163
    %165 = vdwg.mxu0
    %166 = vst [vmem:[#allocation7] sm:$0xff] %v156
    %167 = vst [vmem:[#allocation7 + $0x8] sm:$0xff] %v158
    %168 = vst [vmem:[#allocation7 + $0x10] sm:$0xff] %v162
    %169 = vst [vmem:[#allocation7 + $0x18] sm:$0xff] %v164
    // Predicated region
    $region22: #{encoder_forward.1} parent=1 // pred_check
      _
    $region23: #{encoder_forward.1} parent=1 // pred_check_branch
      %171 = sbr.rel (0) target = $region25
    $region24: #{encoder_forward.1} parent=1 // pred_region
      %s173 = ssub.s32 512, 512
      %174 = vsyncadd [#allocation4], %s173
      %s175 = sshll.u32 [#allocation7], 4
      %s176 = int_to_ptr.vmem [resolvable:$true] %s175
      %181 = dma.vmem_to_hbm [thread:$0]  %s176, 512, %s3, [#allocation4], 256, 256, 16
    $region25: #{encoder_forward.1} parent=1 // pred_fallthru
      _
    // Predicated region
    $region26: #{encoder_forward.1} parent=1 // pred_check
      _
    $region27: #{encoder_forward.1} parent=1 // pred_check_branch
      %183 = sbr.rel (0) target = $region29
    $region28: #{encoder_forward.1} parent=1 // pred_region
      %184 = dma.done [#allocation4], 512
    $region29: #{encoder_forward.1} parent=1 // pred_fallthru
      _
    %185 = vsyncpa [#allocation3], 1
    %186 = vsyncpa [#allocation6], 1
    %187 = vsyncpa [#allocation4], 1

</llo_original>
